<compile_context>
chip_gen: v5e
topology: v5e:2x2
jax: 0.10.0
libtpu: 0.0.40
codegen_flags: <defaults>
</compile_context>

<pallas_src>
import functools

import jax
import jax.numpy as jnp
from jax.experimental import pallas as pl
from jax.experimental.pallas import tpu as pltpu

EPS = 1e-5


def _round_up(x, m):
    return ((x + m - 1) // m) * m


def _layer_norm(x, g, b, e_true):
    """LayerNorm over the last dim; only the first `e_true` lanes are real data.

    Padded lanes of `x`, `g`, `b` are zero, so sums over the padded width equal
    sums over the true width; the centered values are masked before the variance.
    """
    e_pad = x.shape[-1]
    inv_e = 1.0 / float(e_true)
    mu = jnp.sum(x, axis=-1, keepdims=True) * inv_e
    xc = x - mu
    if e_pad != e_true:
        mask = jax.lax.broadcasted_iota(jnp.int32, x.shape, 1) < e_true
        xc = jnp.where(mask, xc, 0.0)
    var = jnp.sum(xc * xc, axis=-1, keepdims=True) * inv_e
    return xc * jax.lax.rsqrt(var + EPS) * g + b


def qal_kernel(doc_ref, qry_ref,
               wv_ref, bv_ref, wo_ref, bo_ref,
               g1_ref, be1_ref,
               w1_ref, b1_ref, w2_ref, b2_ref, w3_ref, b3_ref,
               g2_ref, be2_ref,
               out_ref,
               *, e_true, compute_dtype):
    doc = doc_ref[...].astype(jnp.float32)      # (TB, E_pad) residual path in f32
    qry = qry_ref[...]                          # (TB, E_pad) already compute_dtype

    # --- multi-head attention, seq_len = 1 ---------------------------------
    # softmax over a single key position is exactly 1  =>  attn_output == v.
    # (q/k projections and scaling have zero effect on the output.)
    v = jnp.dot(qry, wv_ref[...], preferred_element_type=jnp.float32) + bv_ref[...]
    attn_out = (jnp.dot(v.astype(compute_dtype), wo_ref[...],
                        preferred_element_type=jnp.float32) + bo_ref[...])

    # --- residual + LayerNorm 1 --------------------------------------------
    x1 = _layer_norm(doc + attn_out, g1_ref[...], be1_ref[...], e_true)

    # --- feed-forward network (dropout = identity in eval) ------------------
    h1 = jnp.maximum(jnp.dot(x1.astype(compute_dtype), w1_ref[...],
                             preferred_element_type=jnp.float32) + b1_ref[...], 0.0)
    h2 = jnp.maximum(jnp.dot(h1.astype(compute_dtype), w2_ref[...],
                             preferred_element_type=jnp.float32) + b2_ref[...], 0.0)
    ff = (jnp.dot(h2.astype(compute_dtype), w3_ref[...],
                  preferred_element_type=jnp.float32) + b3_ref[...])

    # --- residual + LayerNorm 2 --------------------------------------------
    out_ref[...] = _layer_norm(x1 + ff, g2_ref[...], be2_ref[...],
                               e_true).astype(out_ref.dtype)


def _pad2(x, rows, cols):
    return jnp.pad(x, ((0, rows - x.shape[0]), (0, cols - x.shape[1])))


def query_adaptive_layer(doc, qry, params, num_heads,
                         *, compute_dtype=jnp.bfloat16, batch_tile=256):
    """Runs the QueryAdaptiveLayer forward pass as a single Pallas kernel."""
    del num_heads  # per-head softmax over a length-1 key axis is the identity
    B, E = doc.shape
    H = params["w1"].shape[1]

    # Lane-dense padding (last dim multiple of 128) and sublane-aligned batch tile.
    E_pad = _round_up(E, 128)
    H_pad = _round_up(H, 128)
    TB = min(_round_up(batch_tile, 8), _round_up(B, 8))
    B_pad = _round_up(B, TB)

    f32 = jnp.float32
    doc_p = _pad2(doc, B_pad, E_pad).astype(f32)
    qry_p = _pad2(qry, B_pad, E_pad).astype(compute_dtype)

    def w(name, r, c):   # weights in compute dtype (bf16 halves VMEM/HBM traffic)
        return _pad2(params[name], r, c).astype(compute_dtype)

    def b(name, c):      # biases / LN params stay f32 (tiny)
        return _pad2(params[name], 1, c).astype(f32)

    inputs = (doc_p, qry_p,
              w("wv", E_pad, E_pad), b("bv", E_pad),
              w("wo", E_pad, E_pad), b("bo", E_pad),
              b("g1", E_pad), b("be1", E_pad),
              w("w1", E_pad, H_pad), b("b1", H_pad),
              w("w2", H_pad, H_pad), b("b2", H_pad),
              w("w3", H_pad, E_pad), b("b3", E_pad),
              b("g2", E_pad), b("be2", E_pad))

    act_spec = pl.BlockSpec((TB, E_pad), lambda i: (i, 0))
    resident = lambda shape: pl.BlockSpec(shape, lambda i: (0, 0))

    in_specs = [
        act_spec, act_spec,
        resident((E_pad, E_pad)), resident((1, E_pad)),   # wv, bv
        resident((E_pad, E_pad)), resident((1, E_pad)),   # wo, bo
        resident((1, E_pad)), resident((1, E_pad)),       # g1, be1
        resident((E_pad, H_pad)), resident((1, H_pad)),   # w1, b1
        resident((H_pad, H_pad)), resident((1, H_pad)),   # w2, b2
        resident((H_pad, E_pad)), resident((1, E_pad)),   # w3, b3
        resident((1, E_pad)), resident((1, E_pad)),       # g2, be2
    ]

    itemsize = jnp.dtype(compute_dtype).itemsize
    weight_bytes = (2 * E_pad * E_pad + E_pad * H_pad + H_pad * H_pad
                    + H_pad * E_pad) * itemsize
    act_bytes = B_pad * E_pad * (4 + itemsize) + B_pad * E_pad * 4
    cost = pl.CostEstimate(
        flops=2 * B_pad * (2 * E_pad * E_pad + E_pad * H_pad
                           + H_pad * H_pad + H_pad * E_pad),
        transcendentals=2 * B_pad,                         # two rsqrt per row
        bytes_accessed=weight_bytes + act_bytes,
    )

    kernel = functools.partial(qal_kernel, e_true=E, compute_dtype=compute_dtype)

    out_p = pl.pallas_call(
        kernel,
        out_shape=jax.ShapeDtypeStruct((B_pad, E_pad), jnp.float32),
        grid_spec=pltpu.PrefetchScalarGridSpec(
            num_scalar_prefetch=0,
            grid=(B_pad // TB,),
            in_specs=in_specs,
            out_specs=act_spec,
        ),
        compiler_params=pltpu.CompilerParams(
            dimension_semantics=("parallel",)),
        cost_estimate=cost,
    )(*inputs)

    return out_p[:B, :E]


def _reference(doc, qry, params, num_heads):
    """Pure-JAX reference mirroring the full PyTorch forward (eval mode)."""
    B, E = doc.shape
    D = E // num_heads
    scaling = float(D) ** -0.5

    def ln(x, g, b):
        mu = jnp.mean(x, axis=-1, keepdims=True)
        var = jnp.mean((x - mu) ** 2, axis=-1, keepdims=True)
        return (x - mu) * jax.lax.rsqrt(var + EPS) * g + b

    q = doc @ params["wq"] + params["bq"]
    k = qry @ params["wk"] + params["bk"]
    v = qry @ params["wv"] + params["bv"]
    qh = q.reshape(B, num_heads, D)
    kh = k.reshape(B, num_heads, D)
    vh = v.reshape(B, num_heads, D)
    scores = jnp.sum(qh * kh, axis=-1, keepdims=True) * scaling   # (B, H, 1)
    w = jax.nn.softmax(scores, axis=-1)                           # all ones
    attn = (w * vh).reshape(B, E)
    attn_out = attn @ params["wo"] + params["bo"]
    x1 = ln(doc + attn_out, params["g1"], params["be1"])
    h1 = jax.nn.relu(x1 @ params["w1"] + params["b1"])
    h2 = jax.nn.relu(h1 @ params["w2"] + params["b2"])
    ff = h2 @ params["w3"] + params["b3"]
    return ln(x1 + ff, params["g2"], params["be2"])


def init_params(key, embedding_dim, hidden_dim):
    E, H = embedding_dim, hidden_dim
    ks = jax.random.split(key, 16)

    def lin(k, fan_in, fan_out):
        bound = 1.0 / (fan_in ** 0.5)
        kw, kb = jax.random.split(k)
        w = jax.random.uniform(kw, (fan_in, fan_out), jnp.float32, -bound, bound)
        b = jax.random.uniform(kb, (1, fan_out), jnp.float32, -bound, bound)
        return w, b

    p = {}
    p["wq"], p["bq"] = lin(ks[0], E, E)   # kept for the reference; numerically dead
    p["wk"], p["bk"] = lin(ks[1], E, E)   # kept for the reference; numerically dead
    p["wv"], p["bv"] = lin(ks[2], E, E)
    p["wo"], p["bo"] = lin(ks[3], E, E)
    p["g1"], p["be1"] = jnp.ones((1, E), jnp.float32), jnp.zeros((1, E), jnp.float32)
    p["w1"], p["b1"] = lin(ks[4], E, H)
    p["w2"], p["b2"] = lin(ks[5], H, H)
    p["w3"], p["b3"] = lin(ks[6], H, E)
    p["g2"], p["be2"] = jnp.ones((1, E), jnp.float32), jnp.zeros((1, E), jnp.float32)
    return p


if __name__ == "__main__":
    B, E, HID, NUM_HEADS = 8, 32, 32, 4

    key = jax.random.PRNGKey(0)
    k_doc, k_qry, k_par = jax.random.split(key, 3)
    doc = jax.random.normal(k_doc, (B, E), jnp.float32)
    qry = jax.random.normal(k_qry, (B, E), jnp.float32)
    params = init_params(k_par, E, HID)

    ref = _reference(doc, qry, params, NUM_HEADS)

    # Exact-precision path (f32 matmuls) — verifies semantics incl. padding & LN masking.
    out_f32 = query_adaptive_layer(doc, qry, params, NUM_HEADS,
                                   compute_dtype=jnp.float32)
    out_f32 = jax.block_until_ready(out_f32)
    assert out_f32.shape == (B, E)
    assert jnp.allclose(out_f32, ref, atol=1e-4, rtol=1e-4), "f32 mismatch vs reference"

    # Fast path: bf16 matmul operands, f32 accumulation (the production configuration).
    out_bf16 = query_adaptive_layer(doc, qry, params, NUM_HEADS,
                                    compute_dtype=jnp.bfloat16)
    out_bf16 = jax.block_until_ready(out_bf16)
    assert out_bf16.shape == (B, E)
    assert jnp.allclose(out_bf16, ref, atol=5e-2, rtol=5e-2), "bf16 mismatch vs reference"

    print("KERNEL_OK")
</pallas_src>

<mosaic_0001>
module attributes {stable_mosaic.version = 11 : i64} {
  func.func @qal_kernel(%arg0: i32, %arg1: memref<8x128xf32, #tpu.memory_space<vmem>>, %arg2: memref<8x128xf32, #tpu.memory_space<vmem>>, %arg3: memref<128x128xf32, #tpu.memory_space<vmem>>, %arg4: memref<1x128xf32, #tpu.memory_space<vmem>>, %arg5: memref<128x128xf32, #tpu.memory_space<vmem>>, %arg6: memref<1x128xf32, #tpu.memory_space<vmem>>, %arg7: memref<1x128xf32, #tpu.memory_space<vmem>>, %arg8: memref<1x128xf32, #tpu.memory_space<vmem>>, %arg9: memref<128x128xf32, #tpu.memory_space<vmem>>, %arg10: memref<1x128xf32, #tpu.memory_space<vmem>>, %arg11: memref<128x128xf32, #tpu.memory_space<vmem>>, %arg12: memref<1x128xf32, #tpu.memory_space<vmem>>, %arg13: memref<128x128xf32, #tpu.memory_space<vmem>>, %arg14: memref<1x128xf32, #tpu.memory_space<vmem>>, %arg15: memref<1x128xf32, #tpu.memory_space<vmem>>, %arg16: memref<1x128xf32, #tpu.memory_space<vmem>>, %arg17: memref<8x128xf32, #tpu.memory_space<vmem>>) attributes {dimension_semantics = [#tpu.dimension_semantics<parallel>], iteration_bounds = array<i64: 1>, scalar_prefetch = 0 : i64, scratch_operands = 0 : i64, tpu.core_type = #tpu.core_type<tc>, window_params = [{transform_indices = @transform_0, window_bounds = array<i64: 8, 128>}, {transform_indices = @transform_1, window_bounds = array<i64: 8, 128>}, {pipeline_mode = #tpu.pipeline_mode<synchronous>, transform_indices = @transform_2, window_bounds = array<i64: 128, 128>}, {pipeline_mode = #tpu.pipeline_mode<synchronous>, transform_indices = @transform_3, window_bounds = array<i64: 1, 128>}, {pipeline_mode = #tpu.pipeline_mode<synchronous>, transform_indices = @transform_4, window_bounds = array<i64: 128, 128>}, {pipeline_mode = #tpu.pipeline_mode<synchronous>, transform_indices = @transform_5, window_bounds = array<i64: 1, 128>}, {pipeline_mode = #tpu.pipeline_mode<synchronous>, transform_indices = @transform_6, window_bounds = array<i64: 1, 128>}, {pipeline_mode = #tpu.pipeline_mode<synchronous>, transform_indices = @transform_7, window_bounds = array<i64: 1, 128>}, {pipeline_mode = #tpu.pipeline_mode<synchronous>, transform_indices = @transform_8, window_bounds = array<i64: 128, 128>}, {pipeline_mode = #tpu.pipeline_mode<synchronous>, transform_indices = @transform_9, window_bounds = array<i64: 1, 128>}, {pipeline_mode = #tpu.pipeline_mode<synchronous>, transform_indices = @transform_10, window_bounds = array<i64: 128, 128>}, {pipeline_mode = #tpu.pipeline_mode<synchronous>, transform_indices = @transform_11, window_bounds = array<i64: 1, 128>}, {pipeline_mode = #tpu.pipeline_mode<synchronous>, transform_indices = @transform_12, window_bounds = array<i64: 128, 128>}, {pipeline_mode = #tpu.pipeline_mode<synchronous>, transform_indices = @transform_13, window_bounds = array<i64: 1, 128>}, {pipeline_mode = #tpu.pipeline_mode<synchronous>, transform_indices = @transform_14, window_bounds = array<i64: 1, 128>}, {pipeline_mode = #tpu.pipeline_mode<synchronous>, transform_indices = @transform_15, window_bounds = array<i64: 1, 128>}, {transform_indices = @transform_16, window_bounds = array<i64: 8, 128>}]} {
    %c0 = arith.constant 0 : index
    %c0_0 = arith.constant 0 : index
    %0 = vector.load %arg1[%c0, %c0_0] : memref<8x128xf32, #tpu.memory_space<vmem>>, vector<8x128xf32>
    %c0_1 = arith.constant 0 : index
    %c0_2 = arith.constant 0 : index
    %1 = vector.load %arg2[%c0_1, %c0_2] : memref<8x128xf32, #tpu.memory_space<vmem>>, vector<8x128xf32>
    %c0_3 = arith.constant 0 : index
    %c0_4 = arith.constant 0 : index
    %2 = vector.load %arg3[%c0_3, %c0_4] : memref<128x128xf32, #tpu.memory_space<vmem>>, vector<128x128xf32>
    %cst = arith.constant dense<0.000000e+00> : vector<8x128xf32>
    %3 = tpu.matmul %1, %2, %cst {dimension_numbers = #tpu.dot_dimension_numbers<[1], [0], [0], [1], [0, 0, 1, 1], [], []>} : vector<8x128xf32>, vector<128x128xf32>, vector<8x128xf32> -> vector<8x128xf32>
    %c0_5 = arith.constant 0 : index
    %c0_6 = arith.constant 0 : index
    %4 = vector.load %arg4[%c0_5, %c0_6] : memref<1x128xf32, #tpu.memory_space<vmem>>, vector<1x128xf32>
    %5 = vector.broadcast %4 : vector<1x128xf32> to vector<8x128xf32>
    %6 = arith.addf %3, %5 : vector<8x128xf32>
    %c0_7 = arith.constant 0 : index
    %c0_8 = arith.constant 0 : index
    %7 = vector.load %arg5[%c0_7, %c0_8] : memref<128x128xf32, #tpu.memory_space<vmem>>, vector<128x128xf32>
    %cst_9 = arith.constant dense<0.000000e+00> : vector<8x128xf32>
    %8 = tpu.matmul %6, %7, %cst_9 {dimension_numbers = #tpu.dot_dimension_numbers<[1], [0], [0], [1], [0, 0, 1, 1], [], []>} : vector<8x128xf32>, vector<128x128xf32>, vector<8x128xf32> -> vector<8x128xf32>
    %c0_10 = arith.constant 0 : index
    %c0_11 = arith.constant 0 : index
    %9 = vector.load %arg6[%c0_10, %c0_11] : memref<1x128xf32, #tpu.memory_space<vmem>>, vector<1x128xf32>
    %10 = vector.broadcast %9 : vector<1x128xf32> to vector<8x128xf32>
    %11 = arith.addf %8, %10 : vector<8x128xf32>
    %12 = arith.addf %0, %11 : vector<8x128xf32>
    %c0_12 = arith.constant 0 : index
    %c0_13 = arith.constant 0 : index
    %13 = vector.load %arg7[%c0_12, %c0_13] : memref<1x128xf32, #tpu.memory_space<vmem>>, vector<1x128xf32>
    %c0_14 = arith.constant 0 : index
    %c0_15 = arith.constant 0 : index
    %14 = vector.load %arg8[%c0_14, %c0_15] : memref<1x128xf32, #tpu.memory_space<vmem>>, vector<1x128xf32>
    %cst_16 = arith.constant dense<0.000000e+00> : vector<8xf32>
    %15 = vector.multi_reduction <add>, %12, %cst_16 [1] : vector<8x128xf32> to vector<8xf32>
    %16 = vector.shape_cast %15 : vector<8xf32> to vector<8x1xf32>
    %cst_17 = arith.constant 3.125000e-02 : f32
    %17 = vector.broadcast %cst_17 : f32 to vector<8x1xf32>
    %18 = arith.mulf %16, %17 : vector<8x1xf32>
    %19 = vector.broadcast %18 : vector<8x1xf32> to vector<8x128xf32>
    %20 = arith.subf %12, %19 : vector<8x128xf32>
    %21 = tpu.iota {dimensions = array<i32: 1>} : vector<8x128xi32>
    %c32_i32 = arith.constant 32 : i32
    %22 = vector.broadcast %c32_i32 : i32 to vector<8x128xi32>
    %23 = arith.cmpi slt, %21, %22 : vector<8x128xi32>
    %cst_18 = arith.constant 0.000000e+00 : f32
    %24 = vector.broadcast %cst_18 : f32 to vector<8x128xf32>
    %25 = arith.select %23, %20, %24 : vector<8x128xi1>, vector<8x128xf32>
    %26 = arith.mulf %25, %25 : vector<8x128xf32>
    %cst_19 = arith.constant dense<0.000000e+00> : vector<8xf32>
    %27 = vector.multi_reduction <add>, %26, %cst_19 [1] : vector<8x128xf32> to vector<8xf32>
    %28 = vector.shape_cast %27 : vector<8xf32> to vector<8x1xf32>
    %cst_20 = arith.constant 3.125000e-02 : f32
    %29 = vector.broadcast %cst_20 : f32 to vector<8x1xf32>
    %30 = arith.mulf %28, %29 : vector<8x1xf32>
    %cst_21 = arith.constant 9.99999974E-6 : f32
    %31 = vector.broadcast %cst_21 : f32 to vector<8x1xf32>
    %32 = arith.addf %30, %31 : vector<8x1xf32>
    %33 = math.rsqrt %32 : vector<8x1xf32>
    %34 = vector.broadcast %33 : vector<8x1xf32> to vector<8x128xf32>
    %35 = arith.mulf %25, %34 : vector<8x128xf32>
    %36 = vector.broadcast %13 : vector<1x128xf32> to vector<8x128xf32>
    %37 = arith.mulf %35, %36 : vector<8x128xf32>
    %38 = vector.broadcast %14 : vector<1x128xf32> to vector<8x128xf32>
    %39 = arith.addf %37, %38 : vector<8x128xf32>
    %c0_22 = arith.constant 0 : index
    %c0_23 = arith.constant 0 : index
    %40 = vector.load %arg9[%c0_22, %c0_23] : memref<128x128xf32, #tpu.memory_space<vmem>>, vector<128x128xf32>
    %cst_24 = arith.constant dense<0.000000e+00> : vector<8x128xf32>
    %41 = tpu.matmul %39, %40, %cst_24 {dimension_numbers = #tpu.dot_dimension_numbers<[1], [0], [0], [1], [0, 0, 1, 1], [], []>} : vector<8x128xf32>, vector<128x128xf32>, vector<8x128xf32> -> vector<8x128xf32>
    %c0_25 = arith.constant 0 : index
    %c0_26 = arith.constant 0 : index
    %42 = vector.load %arg10[%c0_25, %c0_26] : memref<1x128xf32, #tpu.memory_space<vmem>>, vector<1x128xf32>
    %43 = vector.broadcast %42 : vector<1x128xf32> to vector<8x128xf32>
    %44 = arith.addf %41, %43 : vector<8x128xf32>
    %cst_27 = arith.constant 0.000000e+00 : f32
    %45 = vector.broadcast %cst_27 : f32 to vector<8x128xf32>
    %46 = arith.maximumf %44, %45 : vector<8x128xf32>
    %c0_28 = arith.constant 0 : index
    %c0_29 = arith.constant 0 : index
    %47 = vector.load %arg11[%c0_28, %c0_29] : memref<128x128xf32, #tpu.memory_space<vmem>>, vector<128x128xf32>
    %cst_30 = arith.constant dense<0.000000e+00> : vector<8x128xf32>
    %48 = tpu.matmul %46, %47, %cst_30 {dimension_numbers = #tpu.dot_dimension_numbers<[1], [0], [0], [1], [0, 0, 1, 1], [], []>} : vector<8x128xf32>, vector<128x128xf32>, vector<8x128xf32> -> vector<8x128xf32>
    %c0_31 = arith.constant 0 : index
    %c0_32 = arith.constant 0 : index
    %49 = vector.load %arg12[%c0_31, %c0_32] : memref<1x128xf32, #tpu.memory_space<vmem>>, vector<1x128xf32>
    %50 = vector.broadcast %49 : vector<1x128xf32> to vector<8x128xf32>
    %51 = arith.addf %48, %50 : vector<8x128xf32>
    %cst_33 = arith.constant 0.000000e+00 : f32
    %52 = vector.broadcast %cst_33 : f32 to vector<8x128xf32>
    %53 = arith.maximumf %51, %52 : vector<8x128xf32>
    %c0_34 = arith.constant 0 : index
    %c0_35 = arith.constant 0 : index
    %54 = vector.load %arg13[%c0_34, %c0_35] : memref<128x128xf32, #tpu.memory_space<vmem>>, vector<128x128xf32>
    %cst_36 = arith.constant dense<0.000000e+00> : vector<8x128xf32>
    %55 = tpu.matmul %53, %54, %cst_36 {dimension_numbers = #tpu.dot_dimension_numbers<[1], [0], [0], [1], [0, 0, 1, 1], [], []>} : vector<8x128xf32>, vector<128x128xf32>, vector<8x128xf32> -> vector<8x128xf32>
    %c0_37 = arith.constant 0 : index
    %c0_38 = arith.constant 0 : index
    %56 = vector.load %arg14[%c0_37, %c0_38] : memref<1x128xf32, #tpu.memory_space<vmem>>, vector<1x128xf32>
    %57 = vector.broadcast %56 : vector<1x128xf32> to vector<8x128xf32>
    %58 = arith.addf %55, %57 : vector<8x128xf32>
    %59 = arith.addf %39, %58 : vector<8x128xf32>
    %c0_39 = arith.constant 0 : index
    %c0_40 = arith.constant 0 : index
    %60 = vector.load %arg15[%c0_39, %c0_40] : memref<1x128xf32, #tpu.memory_space<vmem>>, vector<1x128xf32>
    %c0_41 = arith.constant 0 : index
    %c0_42 = arith.constant 0 : index
    %61 = vector.load %arg16[%c0_41, %c0_42] : memref<1x128xf32, #tpu.memory_space<vmem>>, vector<1x128xf32>
    %cst_43 = arith.constant dense<0.000000e+00> : vector<8xf32>
    %62 = vector.multi_reduction <add>, %59, %cst_43 [1] : vector<8x128xf32> to vector<8xf32>
    %63 = vector.shape_cast %62 : vector<8xf32> to vector<8x1xf32>
    %cst_44 = arith.constant 3.125000e-02 : f32
    %64 = vector.broadcast %cst_44 : f32 to vector<8x1xf32>
    %65 = arith.mulf %63, %64 : vector<8x1xf32>
    %66 = vector.broadcast %65 : vector<8x1xf32> to vector<8x128xf32>
    %67 = arith.subf %59, %66 : vector<8x128xf32>
    %68 = tpu.iota {dimensions = array<i32: 1>} : vector<8x128xi32>
    %c32_i32_45 = arith.constant 32 : i32
    %69 = vector.broadcast %c32_i32_45 : i32 to vector<8x128xi32>
    %70 = arith.cmpi slt, %68, %69 : vector<8x128xi32>
    %cst_46 = arith.constant 0.000000e+00 : f32
    %71 = vector.broadcast %cst_46 : f32 to vector<8x128xf32>
    %72 = arith.select %70, %67, %71 : vector<8x128xi1>, vector<8x128xf32>
    %73 = arith.mulf %72, %72 : vector<8x128xf32>
    %cst_47 = arith.constant dense<0.000000e+00> : vector<8xf32>
    %74 = vector.multi_reduction <add>, %73, %cst_47 [1] : vector<8x128xf32> to vector<8xf32>
    %75 = vector.shape_cast %74 : vector<8xf32> to vector<8x1xf32>
    %cst_48 = arith.constant 3.125000e-02 : f32
    %76 = vector.broadcast %cst_48 : f32 to vector<8x1xf32>
    %77 = arith.mulf %75, %76 : vector<8x1xf32>
    %cst_49 = arith.constant 9.99999974E-6 : f32
    %78 = vector.broadcast %cst_49 : f32 to vector<8x1xf32>
    %79 = arith.addf %77, %78 : vector<8x1xf32>
    %80 = math.rsqrt %79 : vector<8x1xf32>
    %81 = vector.broadcast %80 : vector<8x1xf32> to vector<8x128xf32>
    %82 = arith.mulf %72, %81 : vector<8x128xf32>
    %83 = vector.broadcast %60 : vector<1x128xf32> to vector<8x128xf32>
    %84 = arith.mulf %82, %83 : vector<8x128xf32>
    %85 = vector.broadcast %61 : vector<1x128xf32> to vector<8x128xf32>
    %86 = arith.addf %84, %85 : vector<8x128xf32>
    %c0_50 = arith.constant 0 : index
    %c0_51 = arith.constant 0 : index
    %87 = vector.load %arg17[%c0_50, %c0_51] : memref<8x128xf32, #tpu.memory_space<vmem>>, vector<8x128xf32>
    tpu.vector_store %arg17[%c0_50, %c0_51], %86 {strides = array<i32>} : memref<8x128xf32, #tpu.memory_space<vmem>>, vector<8x128xf32>,
    return
  }
  func.func @transform_0(%arg0: i32) -> (i32, i32) {
    %c0_i32 = arith.constant 0 : i32
    %c0_i32_0 = arith.constant 0 : i32
    return %arg0, %c0_i32 : i32, i32
  }
  func.func @transform_1(%arg0: i32) -> (i32, i32) {
    %c0_i32 = arith.constant 0 : i32
    %c0_i32_0 = arith.constant 0 : i32
    return %arg0, %c0_i32 : i32, i32
  }
  func.func @transform_2(%arg0: i32) -> (i32, i32) {
    %c0_i32 = arith.constant 0 : i32
    %c0_i32_0 = arith.constant 0 : i32
    %c0_i32_1 = arith.constant 0 : i32
    return %c0_i32, %c0_i32_0 : i32, i32
  }
  func.func @transform_3(%arg0: i32) -> (i32, i32) {
    %c0_i32 = arith.constant 0 : i32
    %c0_i32_0 = arith.constant 0 : i32
    %c0_i32_1 = arith.constant 0 : i32
    return %c0_i32, %c0_i32_0 : i32, i32
  }
  func.func @transform_4(%arg0: i32) -> (i32, i32) {
    %c0_i32 = arith.constant 0 : i32
    %c0_i32_0 = arith.constant 0 : i32
    %c0_i32_1 = arith.constant 0 : i32
    return %c0_i32, %c0_i32_0 : i32, i32
  }
  func.func @transform_5(%arg0: i32) -> (i32, i32) {
    %c0_i32 = arith.constant 0 : i32
    %c0_i32_0 = arith.constant 0 : i32
    %c0_i32_1 = arith.constant 0 : i32
    return %c0_i32, %c0_i32_0 : i32, i32
  }
  func.func @transform_6(%arg0: i32) -> (i32, i32) {
    %c0_i32 = arith.constant 0 : i32
    %c0_i32_0 = arith.constant 0 : i32
    %c0_i32_1 = arith.constant 0 : i32
    return %c0_i32, %c0_i32_0 : i32, i32
  }
  func.func @transform_7(%arg0: i32) -> (i32, i32) {
    %c0_i32 = arith.constant 0 : i32
    %c0_i32_0 = arith.constant 0 : i32
    %c0_i32_1 = arith.constant 0 : i32
    return %c0_i32, %c0_i32_0 : i32, i32
  }
  func.func @transform_8(%arg0: i32) -> (i32, i32) {
    %c0_i32 = arith.constant 0 : i32
    %c0_i32_0 = arith.constant 0 : i32
    %c0_i32_1 = arith.constant 0 : i32
    return %c0_i32, %c0_i32_0 : i32, i32
  }
  func.func @transform_9(%arg0: i32) -> (i32, i32) {
    %c0_i32 = arith.constant 0 : i32
    %c0_i32_0 = arith.constant 0 : i32
    %c0_i32_1 = arith.constant 0 : i32
    return %c0_i32, %c0_i32_0 : i32, i32
  }
  func.func @transform_10(%arg0: i32) -> (i32, i32) {
    %c0_i32 = arith.constant 0 : i32
    %c0_i32_0 = arith.constant 0 : i32
    %c0_i32_1 = arith.constant 0 : i32
    return %c0_i32, %c0_i32_0 : i32, i32
  }
  func.func @transform_11(%arg0: i32) -> (i32, i32) {
    %c0_i32 = arith.constant 0 : i32
    %c0_i32_0 = arith.constant 0 : i32
    %c0_i32_1 = arith.constant 0 : i32
    return %c0_i32, %c0_i32_0 : i32, i32
  }
  func.func @transform_12(%arg0: i32) -> (i32, i32) {
    %c0_i32 = arith.constant 0 : i32
    %c0_i32_0 = arith.constant 0 : i32
    %c0_i32_1 = arith.constant 0 : i32
    return %c0_i32, %c0_i32_0 : i32, i32
  }
  func.func @transform_13(%arg0: i32) -> (i32, i32) {
    %c0_i32 = arith.constant 0 : i32
    %c0_i32_0 = arith.constant 0 : i32
    %c0_i32_1 = arith.constant 0 : i32
    return %c0_i32, %c0_i32_0 : i32, i32
  }
  func.func @transform_14(%arg0: i32) -> (i32, i32) {
    %c0_i32 = arith.constant 0 : i32
    %c0_i32_0 = arith.constant 0 : i32
    %c0_i32_1 = arith.constant 0 : i32
    return %c0_i32, %c0_i32_0 : i32, i32
  }
  func.func @transform_15(%arg0: i32) -> (i32, i32) {
    %c0_i32 = arith.constant 0 : i32
    %c0_i32_0 = arith.constant 0 : i32
    %c0_i32_1 = arith.constant 0 : i32
    return %c0_i32, %c0_i32_0 : i32, i32
  }
  func.func @transform_16(%arg0: i32) -> (i32, i32) {
    %c0_i32 = arith.constant 0 : i32
    %c0_i32_0 = arith.constant 0 : i32
    return %arg0, %c0_i32 : i32, i32
  }
}

</mosaic_0001>

<llo_original>
// kernel: tpu_custom_call.1
$region0: #{tpu_custom_call.1}
  #allocation0 [shape = 'u32[]', space=smem, size = 0x4, offset = 0x4, fixed_abs, tag = 'smem constant byte address 0x4 - core index']
  #allocation1 [shape = 'u32[72,128]{1,0:T(1,128)}', space=vmem, size = 0x9000, scoped, tag = 'internal scratch']
  %s0 = inlined_call_operand.hbm [shape: f32[8,128], index: 0, kind: input, shape index: {}]
  %s1 = inlined_call_operand.hbm [shape: f32[8,128], index: 1, kind: input, shape index: {}]
  %s2 = inlined_call_operand.hbm [shape: f32[128,128], index: 2, kind: input, shape index: {}]
  %s3 = inlined_call_operand.vmem [shape: f32[1,128], index: 3, kind: input, shape index: {}]
  %s4 = inlined_call_operand.hbm [shape: f32[128,128], index: 4, kind: input, shape index: {}]
  %s5 = inlined_call_operand.vmem [shape: f32[1,128], index: 5, kind: input, shape index: {}]
  %s6 = inlined_call_operand.vmem [shape: f32[1,128], index: 6, kind: input, shape index: {}]
  %s7 = inlined_call_operand.vmem [shape: f32[1,128], index: 7, kind: input, shape index: {}]
  %s8 = inlined_call_operand.hbm [shape: f32[128,128], index: 8, kind: input, shape index: {}]
  %s9 = inlined_call_operand.vmem [shape: f32[1,128], index: 9, kind: input, shape index: {}]
  %s10 = inlined_call_operand.hbm [shape: f32[128,128], index: 10, kind: input, shape index: {}]
  %s11 = inlined_call_operand.vmem [shape: f32[1,128], index: 11, kind: input, shape index: {}]
  %s12 = inlined_call_operand.hbm [shape: f32[128,128], index: 12, kind: input, shape index: {}]
  %s13 = inlined_call_operand.vmem [shape: f32[1,128], index: 13, kind: input, shape index: {}]
  %s14 = inlined_call_operand.vmem [shape: f32[1,128], index: 14, kind: input, shape index: {}]
  %s15 = inlined_call_operand.vmem [shape: f32[1,128], index: 15, kind: input, shape index: {}]
  %s16 = inlined_call_operand.hbm [shape: f32[8,128], index: 16, kind: output, shape index: {}]
  %s17 = sld [smem:[#allocation0]]
  $region102: #{tpu_custom_call.1} parent=0
    _
  %s19 = ssub.s32 1, %s17
  %s20 = scalar_select 0, %s19, %s17
  $region1: #{tpu_custom_call.1} parent=0
    #allocation2 [shape = 'u8[4096]{0}', space=vmem, size = 0x1000, scoped, tag = 'input window, operand 0, single buffered']
    #allocation3 [shape = 's32[1]{0}', space=sflag, size = 0x4, scoped, tag = 'scoped memory for tpu_custom_call.1']
    #allocation4 [shape = 's32[1]{0}', space=sflag, size = 0x4, scoped, tag = 'scoped memory for tpu_custom_call.1']
    #allocation5 [shape = 'u8[4096]{0}', space=vmem, size = 0x1000, scoped, tag = 'input window, operand 1, single buffered']
    #allocation6 [shape = 's32[1]{0}', space=sflag, size = 0x4, scoped, tag = 'scoped memory for tpu_custom_call.1']
    #allocation7 [shape = 'u8[65536]{0}', space=vmem, size = 0x10000, scoped, tag = 'input window, operand 2, single buffered']
    #allocation8 [shape = 'u8[65536]{0}', space=vmem, size = 0x10000, scoped, tag = 'input window, operand 4, single buffered']
    #allocation9 [shape = 's32[1]{0}', space=sflag, size = 0x4, scoped, tag = 'scoped memory for tpu_custom_call.1']
    #allocation10 [shape = 'u8[65536]{0}', space=vmem, size = 0x10000, scoped, tag = 'input window, operand 8, single buffered']
    #allocation11 [shape = 'u8[65536]{0}', space=vmem, size = 0x10000, scoped, tag = 'input window, operand 10, single buffered']
    #allocation12 [shape = 's32[1]{0}', space=sflag, size = 0x4, scoped, tag = 'scoped memory for tpu_custom_call.1']
    #allocation13 [shape = 'u8[65536]{0}', space=vmem, size = 0x10000, scoped, tag = 'input window, operand 12, single buffered']
    #allocation14 [shape = 'u8[4096]{0}', space=vmem, size = 0x1000, scoped, tag = 'output window, operand 0, single buffered']
    %21 = vsyncpa [#allocation3], 0
    %22 = vsyncpa [#allocation6], 0
    %23 = vsyncpa [#allocation9], 0
    %24 = vsyncpa [#allocation12], 0
    %25 = vsyncpa [#allocation4], 0
    // Predicated region
    $region2: #{tpu_custom_call.1} parent=1 // pred_check
      _
    $region3: #{tpu_custom_call.1} parent=1 // pred_check_branch
      %27 = sbr.rel (0) target = $region5
    $region4: #{tpu_custom_call.1} parent=1 // pred_region
      %29 = vsyncadd [#allocation3], 0
      %s31 = sshll.u32 %s0, 4
      %s32 = int_to_ptr.hbm [resolvable:$true] %s31
      %s33 = sshll.u32 [#allocation2], 4
      %s34 = int_to_ptr.vmem [resolvable:$true] %s33
      %36 = dma.hbm_to_vmem [thread:$0]  %s32, 128, %s34, [#allocation3]
    $region5: #{tpu_custom_call.1} parent=1 // pred_fallthru
      _
    // Predicated region
    $region6: #{tpu_custom_call.1} parent=1 // pred_check
      _
    $region7: #{tpu_custom_call.1} parent=1 // pred_check_branch
      %38 = sbr.rel (0) target = $region9
    $region8: #{tpu_custom_call.1} parent=1 // pred_region
      %40 = vsyncadd [#allocation6], 0
      %s42 = sshll.u32 %s1, 4
      %s43 = int_to_ptr.hbm [resolvable:$true] %s42
      %s44 = sshll.u32 [#allocation5], 4
      %s45 = int_to_ptr.vmem [resolvable:$true] %s44
      %47 = dma.hbm_to_vmem [thread:$0]  %s43, 128, %s45, [#allocation6]
    $region9: #{tpu_custom_call.1} parent=1 // pred_fallthru
      _
    // Predicated region
    $region10: #{tpu_custom_call.1} parent=1 // pred_check
      _
    $region11: #{tpu_custom_call.1} parent=1 // pred_check_branch
      %49 = sbr.rel (0) target = $region13
    $region12: #{tpu_custom_call.1} parent=1 // pred_region
      %51 = vsyncadd [#allocation6], 0
      %s52 = sshll.u32 %s2, 4
      %s53 = int_to_ptr.hbm [resolvable:$true] %s52
      %s54 = sshll.u32 [#allocation7], 4
      %s55 = int_to_ptr.vmem [resolvable:$true] %s54
      %60 = dma.hbm_to_vmem [thread:$0]  %s53, 2048, %s55, [#allocation6], 128, 128, 8
    $region13: #{tpu_custom_call.1} parent=1 // pred_fallthru
      _
    // Predicated region
    $region14: #{tpu_custom_call.1} parent=1 // pred_check
      _
    $region15: #{tpu_custom_call.1} parent=1 // pred_check_branch
      %62 = sbr.rel (0) target = $region17
    $region16: #{tpu_custom_call.1} parent=1 // pred_region
      _
    $region17: #{tpu_custom_call.1} parent=1 // pred_fallthru
      _
    // Predicated region
    $region18: #{tpu_custom_call.1} parent=1 // pred_check
      _
    $region19: #{tpu_custom_call.1} parent=1 // pred_check_branch
      %64 = sbr.rel (0) target = $region21
    $region20: #{tpu_custom_call.1} parent=1 // pred_region
      %66 = vsyncadd [#allocation9], 0
      %s67 = sshll.u32 %s4, 4
      %s68 = int_to_ptr.hbm [resolvable:$true] %s67
      %s69 = sshll.u32 [#allocation8], 4
      %s70 = int_to_ptr.vmem [resolvable:$true] %s69
      %75 = dma.hbm_to_vmem [thread:$0]  %s68, 2048, %s70, [#allocation9], 128, 128, 8
    $region21: #{tpu_custom_call.1} parent=1 // pred_fallthru
      _
    // Predicated region
    $region22: #{tpu_custom_call.1} parent=1 // pred_check
      _
    $region23: #{tpu_custom_call.1} parent=1 // pred_check_branch
      %77 = sbr.rel (0) target = $region25
    $region24: #{tpu_custom_call.1} parent=1 // pred_region
      _
    $region25: #{tpu_custom_call.1} parent=1 // pred_fallthru
      _
    // Predicated region
    $region26: #{tpu_custom_call.1} parent=1 // pred_check
      _
    $region27: #{tpu_custom_call.1} parent=1 // pred_check_branch
      %79 = sbr.rel (0) target = $region29
    $region28: #{tpu_custom_call.1} parent=1 // pred_region
      _
    $region29: #{tpu_custom_call.1} parent=1 // pred_fallthru
      _
    // Predicated region
    $region30: #{tpu_custom_call.1} parent=1 // pred_check
      _
    $region31: #{tpu_custom_call.1} parent=1 // pred_check_branch
      %81 = sbr.rel (0) target = $region33
    $region32: #{tpu_custom_call.1} parent=1 // pred_region
      _
    $region33: #{tpu_custom_call.1} parent=1 // pred_fallthru
      _
    // Predicated region
    $region34: #{tpu_custom_call.1} parent=1 // pred_check
      _
    $region35: #{tpu_custom_call.1} parent=1 // pred_check_branch
      %83 = sbr.rel (0) target = $region37
    $region36: #{tpu_custom_call.1} parent=1 // pred_region
      %85 = vsyncadd [#allocation9], 0
      %s86 = sshll.u32 %s8, 4
      %s87 = int_to_ptr.hbm [resolvable:$true] %s86
      %s88 = sshll.u32 [#allocation10], 4
      %s89 = int_to_ptr.vmem [resolvable:$true] %s88
      %94 = dma.hbm_to_vmem [thread:$0]  %s87, 2048, %s89, [#allocation9], 128, 128, 8
    $region37: #{tpu_custom_call.1} parent=1 // pred_fallthru
      _
    // Predicated region
    $region38: #{tpu_custom_call.1} parent=1 // pred_check
      _
    $region39: #{tpu_custom_call.1} parent=1 // pred_check_branch
      %96 = sbr.rel (0) target = $region41
    $region40: #{tpu_custom_call.1} parent=1 // pred_region
      _
    $region41: #{tpu_custom_call.1} parent=1 // pred_fallthru
      _
    // Predicated region
    $region42: #{tpu_custom_call.1} parent=1 // pred_check
      _
    $region43: #{tpu_custom_call.1} parent=1 // pred_check_branch
      %98 = sbr.rel (0) target = $region45
    $region44: #{tpu_custom_call.1} parent=1 // pred_region
      %100 = vsyncadd [#allocation12], 0
      %s101 = sshll.u32 %s10, 4
      %s102 = int_to_ptr.hbm [resolvable:$true] %s101
      %s103 = sshll.u32 [#allocation11], 4
      %s104 = int_to_ptr.vmem [resolvable:$true] %s103
      %109 = dma.hbm_to_vmem [thread:$0]  %s102, 2048, %s104, [#allocation12], 128, 128, 8
    $region45: #{tpu_custom_call.1} parent=1 // pred_fallthru
      _
    // Predicated region
    $region46: #{tpu_custom_call.1} parent=1 // pred_check
      _
    $region47: #{tpu_custom_call.1} parent=1 // pred_check_branch
      %111 = sbr.rel (0) target = $region49
    $region48: #{tpu_custom_call.1} parent=1 // pred_region
      _
    $region49: #{tpu_custom_call.1} parent=1 // pred_fallthru
      _
    // Predicated region
    $region50: #{tpu_custom_call.1} parent=1 // pred_check
      _
    $region51: #{tpu_custom_call.1} parent=1 // pred_check_branch
      %113 = sbr.rel (0) target = $region53
    $region52: #{tpu_custom_call.1} parent=1 // pred_region
      %115 = vsyncadd [#allocation12], 0
      %s116 = sshll.u32 %s12, 4
      %s117 = int_to_ptr.hbm [resolvable:$true] %s116
      %s118 = sshll.u32 [#allocation13], 4
      %s119 = int_to_ptr.vmem [resolvable:$true] %s118
      %124 = dma.hbm_to_vmem [thread:$0]  %s117, 2048, %s119, [#allocation12], 128, 128, 8
    $region53: #{tpu_custom_call.1} parent=1 // pred_fallthru
      _
    // Predicated region
    $region54: #{tpu_custom_call.1} parent=1 // pred_check
      _
    $region55: #{tpu_custom_call.1} parent=1 // pred_check_branch
      %126 = sbr.rel (0) target = $region57
    $region56: #{tpu_custom_call.1} parent=1 // pred_region
      _
    $region57: #{tpu_custom_call.1} parent=1 // pred_fallthru
      _
    // Predicated region
    $region58: #{tpu_custom_call.1} parent=1 // pred_check
      _
    $region59: #{tpu_custom_call.1} parent=1 // pred_check_branch
      %128 = sbr.rel (0) target = $region61
    $region60: #{tpu_custom_call.1} parent=1 // pred_region
      _
    $region61: #{tpu_custom_call.1} parent=1 // pred_fallthru
      _
    // Predicated region
    $region62: #{tpu_custom_call.1} parent=1 // pred_check
      _
    $region63: #{tpu_custom_call.1} parent=1 // pred_check_branch
      %130 = sbr.rel (0) target = $region65
    $region64: #{tpu_custom_call.1} parent=1 // pred_region
      _
    $region65: #{tpu_custom_call.1} parent=1 // pred_fallthru
      _
    // Predicated region
    $region66: #{tpu_custom_call.1} parent=1 // pred_check
      _
    $region67: #{tpu_custom_call.1} parent=1 // pred_check_branch
      %132 = sbr.rel (0) target = $region69
    $region68: #{tpu_custom_call.1} parent=1 // pred_region
      %134 = dma.done [#allocation3], 128
    $region69: #{tpu_custom_call.1} parent=1 // pred_fallthru
      _
    // Predicated region
    $region70: #{tpu_custom_call.1} parent=1 // pred_check
      _
    $region71: #{tpu_custom_call.1} parent=1 // pred_check_branch
      %136 = sbr.rel (0) target = $region73
    $region72: #{tpu_custom_call.1} parent=1 // pred_region
      %138 = dma.done [#allocation6], 128
    $region73: #{tpu_custom_call.1} parent=1 // pred_fallthru
      _
    // Predicated region
    $region74: #{tpu_custom_call.1} parent=1 // pred_check
      _
    $region75: #{tpu_custom_call.1} parent=1 // pred_check_branch
      %140 = sbr.rel (0) target = $region77
    $region76: #{tpu_custom_call.1} parent=1 // pred_region
      %142 = dma.done [#allocation6], 2048
    $region77: #{tpu_custom_call.1} parent=1 // pred_fallthru
      _
    // Predicated region
    $region78: #{tpu_custom_call.1} parent=1 // pred_check
      _
    $region79: #{tpu_custom_call.1} parent=1 // pred_check_branch
      %144 = sbr.rel (0) target = $region81
    $region80: #{tpu_custom_call.1} parent=1 // pred_region
      %146 = dma.done [#allocation9], 2048
    $region81: #{tpu_custom_call.1} parent=1 // pred_fallthru
      _
    // Predicated region
    $region82: #{tpu_custom_call.1} parent=1 // pred_check
      _
    $region83: #{tpu_custom_call.1} parent=1 // pred_check_branch
      %148 = sbr.rel (0) target = $region85
    $region84: #{tpu_custom_call.1} parent=1 // pred_region
      %150 = dma.done [#allocation9], 2048
    $region85: #{tpu_custom_call.1} parent=1 // pred_fallthru
      _
    // Predicated region
    $region86: #{tpu_custom_call.1} parent=1 // pred_check
      _
    $region87: #{tpu_custom_call.1} parent=1 // pred_check_branch
      %152 = sbr.rel (0) target = $region89
    $region88: #{tpu_custom_call.1} parent=1 // pred_region
      %154 = dma.done [#allocation12], 2048
    $region89: #{tpu_custom_call.1} parent=1 // pred_fallthru
      _
    // Predicated region
    $region90: #{tpu_custom_call.1} parent=1 // pred_check
      _
    $region91: #{tpu_custom_call.1} parent=1 // pred_check_branch
      %156 = sbr.rel (0) target = $region93
    $region92: #{tpu_custom_call.1} parent=1 // pred_region
      %158 = dma.done [#allocation12], 2048
    $region93: #{tpu_custom_call.1} parent=1 // pred_fallthru
      _
    %v159 = vld [vmem:[#allocation2] sm:$0xff]
    %v160 = vld [vmem:[#allocation5] sm:$0xff]
    %v161 = vld [vmem:[#allocation7] sm:$0xff]
    %v162 = vld [vmem:[#allocation7 + $0x8] sm:$0xff]
    %v163 = vld [vmem:[#allocation7 + $0x10] sm:$0xff]
    %v164 = vld [vmem:[#allocation7 + $0x18] sm:$0xff]
    %v165 = vld [vmem:[#allocation7 + $0x20] sm:$0xff]
    %v166 = vld [vmem:[#allocation7 + $0x28] sm:$0xff]
    %v167 = vld [vmem:[#allocation7 + $0x30] sm:$0xff]
    %v168 = vld [vmem:[#allocation7 + $0x38] sm:$0xff]
    %v169 = vld [vmem:[#allocation7 + $0x40] sm:$0xff]
    %v170 = vld [vmem:[#allocation7 + $0x48] sm:$0xff]
    %v171 = vld [vmem:[#allocation7 + $0x50] sm:$0xff]
    %v172 = vld [vmem:[#allocation7 + $0x58] sm:$0xff]
    %v173 = vld [vmem:[#allocation7 + $0x60] sm:$0xff]
    %v174 = vld [vmem:[#allocation7 + $0x68] sm:$0xff]
    %v175 = vld [vmem:[#allocation7 + $0x70] sm:$0xff]
    %v176 = vld [vmem:[#allocation7 + $0x78] sm:$0xff]
    %v177 = vld [vmem:[%s3] sm:$0x1]
    %v179 = vperm.slane %v177, 0
    %181 = vmatpush.msra.mxu0 %v176
    %182 = vmatpush.msra.mxu0 %v175
    %183 = vmatpush.msra.mxu0 %v174
    %184 = vmatpush.msra.mxu0 %v173
    %185 = vmatpush.msra.mxu0 %v172
    %186 = vmatpush.msra.mxu0 %v171
    %187 = vmatpush.msra.mxu0 %v170
    %188 = vmatpush.msra.mxu0 %v169
    %189 = vmatpush.msra.mxu0 %v168
    %190 = vmatpush.msra.mxu0 %v167
    %191 = vmatpush.msra.mxu0 %v166
    %192 = vmatpush.msra.mxu0 %v165
    %193 = vmatpush.msra.mxu0 %v164
    %194 = vmatpush.msra.mxu0 %v163
    %195 = vmatpush.msra.mxu0 %v162
    %196 = vmatpush.msra.mxu0 %v161
    %197 = vmatmul.f32.gmra.mxu0 %v160
    %v198 = vpop.f32.mrf.mxu0
    %v199 = vadd.f32 %v179, %v198
    %200 = vdwg.mxu0
    %v201 = vld [vmem:[#allocation8] sm:$0xff]
    %v202 = vld [vmem:[#allocation8 + $0x8] sm:$0xff]
    %v203 = vld [vmem:[#allocation8 + $0x10] sm:$0xff]
    %v204 = vld [vmem:[#allocation8 + $0x18] sm:$0xff]
    %v205 = vld [vmem:[#allocation8 + $0x20] sm:$0xff]
    %v206 = vld [vmem:[#allocation8 + $0x28] sm:$0xff]
    %v207 = vld [vmem:[#allocation8 + $0x30] sm:$0xff]
    %v208 = vld [vmem:[#allocation8 + $0x38] sm:$0xff]
    %v209 = vld [vmem:[#allocation8 + $0x40] sm:$0xff]
    %v210 = vld [vmem:[#allocation8 + $0x48] sm:$0xff]
    %v211 = vld [vmem:[#allocation8 + $0x50] sm:$0xff]
    %v212 = vld [vmem:[#allocation8 + $0x58] sm:$0xff]
    %v213 = vld [vmem:[#allocation8 + $0x60] sm:$0xff]
    %v214 = vld [vmem:[#allocation8 + $0x68] sm:$0xff]
    %v215 = vld [vmem:[#allocation8 + $0x70] sm:$0xff]
    %v216 = vld [vmem:[#allocation8 + $0x78] sm:$0xff]
    %v217 = vld [vmem:[%s5] sm:$0x1]
    %v219 = vperm.slane %v217, 0
    %221 = vmatpush.msra.mxu0 %v216
    %222 = vmatpush.msra.mxu0 %v215
    %223 = vmatpush.msra.mxu0 %v214
    %224 = vmatpush.msra.mxu0 %v213
    %225 = vmatpush.msra.mxu0 %v212
    %226 = vmatpush.msra.mxu0 %v211
    %227 = vmatpush.msra.mxu0 %v210
    %228 = vmatpush.msra.mxu0 %v209
    %229 = vmatpush.msra.mxu0 %v208
    %230 = vmatpush.msra.mxu0 %v207
    %231 = vmatpush.msra.mxu0 %v206
    %232 = vmatpush.msra.mxu0 %v205
    %233 = vmatpush.msra.mxu0 %v204
    %234 = vmatpush.msra.mxu0 %v203
    %235 = vmatpush.msra.mxu0 %v202
    %236 = vmatpush.msra.mxu0 %v201
    %237 = vmatmul.f32.gmra.mxu0 %v199
    %v238 = vpop.f32.mrf.mxu0
    %v239 = vadd.f32 %v219, %v238
    %240 = vdwg.mxu0
    %v241 = vadd.f32 %v159, %v239
    %v242 = vld [vmem:[%s6] sm:$0x1]
    %v243 = vld [vmem:[%s7] sm:$0x1]
    %244 = vadd.xlane.f32.xlu0 %v241
    %v245 = vpop.xlane.xlu0 %244
    %v246 = vmul.f32 %v245, 0.03125
    %v247 = vsub.f32 %v241, %v246
    %v248 = vlaneseq
    %v249 = vand.u32 %v248, 127
    %vm250 = vcmp.lt.s32.totalorder %v249, 32
    %v251 = vsel %vm250, %v247, 0.0
    %v252 = vmul.f32 %v251, %v251
    %253 = vadd.xlane.f32.xlu0 %v252
    %v254 = vpop.xlane.xlu0 %253
    %v255 = vmul.f32 %v254, 0.03125
    %v256 = vadd.f32 %v255, 1e-05
    %v257 = vrsqrt.pop %v256
    %v258 = vmul.f32 %v257, %v256
    %v259 = vmul.f32 %v258, %v257
    %v260 = vmul.f32 0.5, %v259
    %v261 = vsub.f32 1.5, %v260
    %v262 = vmul.f32 %v257, %v261
    %vm263 = vweird.f32 %v256
    %vm264 = vweird.f32 %v257
    %vm265 = vmor %vm263, %vm264
    %v266 = vsel %vm265, %v257, %v262
    %v267 = vmul.f32 %v251, %v266
    %v269 = vperm.slane %v242, 0
    %v271 = vmul.f32 %v267, %v269
    %v273 = vperm.slane %v243, 0
    %v275 = vadd.f32 %v271, %v273
    %v276 = vld [vmem:[#allocation10] sm:$0xff]
    %v277 = vld [vmem:[#allocation10 + $0x8] sm:$0xff]
    %v278 = vld [vmem:[#allocation10 + $0x10] sm:$0xff]
    %v279 = vld [vmem:[#allocation10 + $0x18] sm:$0xff]
    %v280 = vld [vmem:[#allocation10 + $0x20] sm:$0xff]
    %v281 = vld [vmem:[#allocation10 + $0x28] sm:$0xff]
    %v282 = vld [vmem:[#allocation10 + $0x30] sm:$0xff]
    %v283 = vld [vmem:[#allocation10 + $0x38] sm:$0xff]
    %v284 = vld [vmem:[#allocation10 + $0x40] sm:$0xff]
    %v285 = vld [vmem:[#allocation10 + $0x48] sm:$0xff]
    %v286 = vld [vmem:[#allocation10 + $0x50] sm:$0xff]
    %v287 = vld [vmem:[#allocation10 + $0x58] sm:$0xff]
    %v288 = vld [vmem:[#allocation10 + $0x60] sm:$0xff]
    %v289 = vld [vmem:[#allocation10 + $0x68] sm:$0xff]
    %v290 = vld [vmem:[#allocation10 + $0x70] sm:$0xff]
    %v291 = vld [vmem:[#allocation10 + $0x78] sm:$0xff]
    %v292 = vld [vmem:[%s9] sm:$0x1]
    %v294 = vperm.slane %v292, 0
    %296 = vmatpush.msra.mxu0 %v291
    %297 = vmatpush.msra.mxu0 %v290
    %298 = vmatpush.msra.mxu0 %v289
    %299 = vmatpush.msra.mxu0 %v288
    %300 = vmatpush.msra.mxu0 %v287
    %301 = vmatpush.msra.mxu0 %v286
    %302 = vmatpush.msra.mxu0 %v285
    %303 = vmatpush.msra.mxu0 %v284
    %304 = vmatpush.msra.mxu0 %v283
    %305 = vmatpush.msra.mxu0 %v282
    %306 = vmatpush.msra.mxu0 %v281
    %307 = vmatpush.msra.mxu0 %v280
    %308 = vmatpush.msra.mxu0 %v279
    %309 = vmatpush.msra.mxu0 %v278
    %310 = vmatpush.msra.mxu0 %v277
    %311 = vmatpush.msra.mxu0 %v276
    %312 = vmatmul.f32.gmra.mxu0 %v275
    %v313 = vpop.f32.mrf.mxu0
    %v314 = vadd.f32 %v294, %v313
    %315 = vdwg.mxu0
    %v316 = vmax.f32 %v314, 0.0
    %v317 = vld [vmem:[#allocation11] sm:$0xff]
    %v318 = vld [vmem:[#allocation11 + $0x8] sm:$0xff]
    %v319 = vld [vmem:[#allocation11 + $0x10] sm:$0xff]
    %v320 = vld [vmem:[#allocation11 + $0x18] sm:$0xff]
    %v321 = vld [vmem:[#allocation11 + $0x20] sm:$0xff]
    %v322 = vld [vmem:[#allocation11 + $0x28] sm:$0xff]
    %v323 = vld [vmem:[#allocation11 + $0x30] sm:$0xff]
    %v324 = vld [vmem:[#allocation11 + $0x38] sm:$0xff]
    %v325 = vld [vmem:[#allocation11 + $0x40] sm:$0xff]
    %v326 = vld [vmem:[#allocation11 + $0x48] sm:$0xff]
    %v327 = vld [vmem:[#allocation11 + $0x50] sm:$0xff]
    %v328 = vld [vmem:[#allocation11 + $0x58] sm:$0xff]
    %v329 = vld [vmem:[#allocation11 + $0x60] sm:$0xff]
    %v330 = vld [vmem:[#allocation11 + $0x68] sm:$0xff]
    %v331 = vld [vmem:[#allocation11 + $0x70] sm:$0xff]
    %v332 = vld [vmem:[#allocation11 + $0x78] sm:$0xff]
    %v333 = vld [vmem:[%s11] sm:$0x1]
    %v335 = vperm.slane %v333, 0
    %337 = vmatpush.msra.mxu0 %v332
    %338 = vmatpush.msra.mxu0 %v331
    %339 = vmatpush.msra.mxu0 %v330
    %340 = vmatpush.msra.mxu0 %v329
    %341 = vmatpush.msra.mxu0 %v328
    %342 = vmatpush.msra.mxu0 %v327
    %343 = vmatpush.msra.mxu0 %v326
    %344 = vmatpush.msra.mxu0 %v325
    %345 = vmatpush.msra.mxu0 %v324
    %346 = vmatpush.msra.mxu0 %v323
    %347 = vmatpush.msra.mxu0 %v322
    %348 = vmatpush.msra.mxu0 %v321
    %349 = vmatpush.msra.mxu0 %v320
    %350 = vmatpush.msra.mxu0 %v319
    %351 = vmatpush.msra.mxu0 %v318
    %352 = vmatpush.msra.mxu0 %v317
    %353 = vmatmul.f32.gmra.mxu0 %v316
    %v354 = vpop.f32.mrf.mxu0
    %v355 = vadd.f32 %v335, %v354
    %356 = vdwg.mxu0
    %v357 = vmax.f32 %v355, 0.0
    %v358 = vld [vmem:[#allocation13] sm:$0xff]
    %v359 = vld [vmem:[#allocation13 + $0x8] sm:$0xff]
    %v360 = vld [vmem:[#allocation13 + $0x10] sm:$0xff]
    %v361 = vld [vmem:[#allocation13 + $0x18] sm:$0xff]
    %v362 = vld [vmem:[#allocation13 + $0x20] sm:$0xff]
    %v363 = vld [vmem:[#allocation13 + $0x28] sm:$0xff]
    %v364 = vld [vmem:[#allocation13 + $0x30] sm:$0xff]
    %v365 = vld [vmem:[#allocation13 + $0x38] sm:$0xff]
    %v366 = vld [vmem:[#allocation13 + $0x40] sm:$0xff]
    %v367 = vld [vmem:[#allocation13 + $0x48] sm:$0xff]
    %v368 = vld [vmem:[#allocation13 + $0x50] sm:$0xff]
    %v369 = vld [vmem:[#allocation13 + $0x58] sm:$0xff]
    %v370 = vld [vmem:[#allocation13 + $0x60] sm:$0xff]
    %v371 = vld [vmem:[#allocation13 + $0x68] sm:$0xff]
    %v372 = vld [vmem:[#allocation13 + $0x70] sm:$0xff]
    %v373 = vld [vmem:[#allocation13 + $0x78] sm:$0xff]
    %v374 = vld [vmem:[%s13] sm:$0x1]
    %v376 = vperm.slane %v374, 0
    %378 = vmatpush.msra.mxu0 %v373
    %379 = vmatpush.msra.mxu0 %v372
    %380 = vmatpush.msra.mxu0 %v371
    %381 = vmatpush.msra.mxu0 %v370
    %382 = vmatpush.msra.mxu0 %v369
    %383 = vmatpush.msra.mxu0 %v368
    %384 = vmatpush.msra.mxu0 %v367
    %385 = vmatpush.msra.mxu0 %v366
    %386 = vmatpush.msra.mxu0 %v365
    %387 = vmatpush.msra.mxu0 %v364
    %388 = vmatpush.msra.mxu0 %v363
    %389 = vmatpush.msra.mxu0 %v362
    %390 = vmatpush.msra.mxu0 %v361
    %391 = vmatpush.msra.mxu0 %v360
    %392 = vmatpush.msra.mxu0 %v359
    %393 = vmatpush.msra.mxu0 %v358
    %394 = vmatmul.f32.gmra.mxu0 %v357
    %v395 = vpop.f32.mrf.mxu0
    %v396 = vadd.f32 %v376, %v395
    %397 = vdwg.mxu0
    %v398 = vadd.f32 %v275, %v396
    %v399 = vld [vmem:[%s14] sm:$0x1]
    %v400 = vld [vmem:[%s15] sm:$0x1]
    %401 = vadd.xlane.f32.xlu0 %v398
    %v402 = vpop.xlane.xlu0 %401
    %v403 = vmul.f32 %v402, 0.03125
    %v404 = vsub.f32 %v398, %v403
    %v405 = vsel %vm250, %v404, 0.0
    %v406 = vmul.f32 %v405, %v405
    %407 = vadd.xlane.f32.xlu0 %v406
    %v408 = vpop.xlane.xlu0 %407
    %v409 = vmul.f32 %v408, 0.03125
    %v410 = vadd.f32 %v409, 1e-05
    %v411 = vrsqrt.pop %v410
    %v412 = vmul.f32 %v411, %v410
    %v413 = vmul.f32 %v412, %v411
    %v414 = vmul.f32 0.5, %v413
    %v415 = vsub.f32 1.5, %v414
    %v416 = vmul.f32 %v411, %v415
    %vm417 = vweird.f32 %v410
    %vm418 = vweird.f32 %v411
    %vm419 = vmor %vm417, %vm418
    %v420 = vsel %vm419, %v411, %v416
    %v421 = vmul.f32 %v405, %v420
    %v423 = vperm.slane %v399, 0
    %v425 = vmul.f32 %v421, %v423
    %v427 = vperm.slane %v400, 0
    %v429 = vadd.f32 %v425, %v427
    %430 = vst [vmem:[#allocation14] sm:$0xff] %v429
    // Predicated region
    $region94: #{tpu_custom_call.1} parent=1 // pred_check
      _
    $region95: #{tpu_custom_call.1} parent=1 // pred_check_branch
      %432 = sbr.rel (0) target = $region97
    $region96: #{tpu_custom_call.1} parent=1 // pred_region
      %434 = vsyncadd [#allocation4], 0
      %s436 = sshll.u32 [#allocation14], 4
      %s437 = int_to_ptr.vmem [resolvable:$true] %s436
      %s438 = sshll.u32 %s16, 4
      %s439 = int_to_ptr.hbm [resolvable:$true] %s438
      %441 = dma.vmem_to_hbm [thread:$0]  %s437, 128, %s439, [#allocation4]
    $region97: #{tpu_custom_call.1} parent=1 // pred_fallthru
      _
    // Predicated region
    $region98: #{tpu_custom_call.1} parent=1 // pred_check
      _
    $region99: #{tpu_custom_call.1} parent=1 // pred_check_branch
      %443 = sbr.rel (0) target = $region101
    $region100: #{tpu_custom_call.1} parent=1 // pred_region
      %445 = dma.done [#allocation4], 128
    $region101: #{tpu_custom_call.1} parent=1 // pred_fallthru
      _
    %446 = vsyncpa [#allocation3], 1
    %447 = vsyncpa [#allocation6], 1
    %448 = vsyncpa [#allocation9], 1
    %449 = vsyncpa [#allocation12], 1
    %450 = vsyncpa [#allocation4], 1

</llo_original>
